<compile_context>
chip_gen: v7x
topology: tpu7x:2x2x1
jax: 0.10.0
libtpu: 0.0.40
codegen_flags: <defaults>
</compile_context>

<pallas_src>
import functools

import jax
import jax.numpy as jnp
from jax.experimental import pallas as pl
from jax.experimental.pallas import tpu as pltpu


def _round_up(x, m):
    return (x + m - 1) // m * m


def _cdiv(a, b):
    return (a + b - 1) // b


def actor_kernel(s_ref, w1_ref, w2_ref, w3_ref, b_ref, o_ref):
    hid = w2_ref.shape[1]   # padded hidden width (multiple of 128)
    out = w3_ref.shape[1]   # padded output width (multiple of 128)
    cdt = w1_ref.dtype      # MXU compute dtype (bf16 by default)

    # layer 1: [TB, in_pad] @ [in_pad, hid] -> f32 accumulation on the MXU
    h = jnp.dot(s_ref[...], w1_ref[...], preferred_element_type=jnp.float32)
    h = jnp.maximum(h + b_ref[0:1, :hid], 0.0)
    # layer 2: [TB, hid] @ [hid, hid]
    h = jnp.dot(h.astype(cdt), w2_ref[...], preferred_element_type=jnp.float32)
    h = jnp.maximum(h + b_ref[1:2, :hid], 0.0)
    # layer 3 + 3 * tanh (f32 elementwise, lane-dense store)
    h = jnp.dot(h.astype(cdt), w3_ref[...], preferred_element_type=jnp.float32)
    o_ref[...] = (3.0 * jnp.tanh(h + b_ref[2:3, :out])).astype(o_ref.dtype)


def prepare_actor_params(params, *, compute_dtype=jnp.bfloat16):
    """One-time (per param update) preprocessing of Actor parameters.

    params = (w1, b1, w2, b2, w3, b3); w_i is [in, out] (transpose of
    PyTorch's nn.Linear weight), b_i is [1, out] or [out].

    Returns (prepared_arrays, output_size).  `prepared_arrays` is passed to
    `actor_forward` on every call; `output_size` is a static int for slicing.
    """
    w1, b1, w2, b2, w3, b3 = params
    input_size, hidden_size = w1.shape
    output_size = w3.shape[1]

    in_pad = _round_up(input_size, 128)
    hid_pad = _round_up(hidden_size, 128)
    out_pad = _round_up(output_size, 128)
    lane_pad = max(hid_pad, out_pad)

    # Zero-pad feature dims (mathematically inert) and cast to the MXU dtype.
    w1_p = jnp.pad(w1, ((0, in_pad - input_size),
                        (0, hid_pad - hidden_size))).astype(compute_dtype)
    w2_p = jnp.pad(w2, ((0, hid_pad - hidden_size),
                        (0, hid_pad - hidden_size))).astype(compute_dtype)
    w3_p = jnp.pad(w3, ((0, hid_pad - hidden_size),
                        (0, out_pad - output_size))).astype(compute_dtype)

    # Pack the three biases into one f32 slab -> a single tiny DMA.
    b_pack = jnp.zeros((8, lane_pad), jnp.float32)
    b_pack = b_pack.at[0, :hidden_size].set(b1.reshape(-1).astype(jnp.float32))
    b_pack = b_pack.at[1, :hidden_size].set(b2.reshape(-1).astype(jnp.float32))
    b_pack = b_pack.at[2, :output_size].set(b3.reshape(-1).astype(jnp.float32))

    return (w1_p, w2_p, w3_p, b_pack), output_size


@functools.partial(jax.jit, static_argnames=("output_size", "out_dtype"))
def actor_forward(s, prepared, *, output_size, out_dtype=jnp.float32):
    """Per-call forward.  `prepared` comes from `prepare_actor_params`."""
    w1_p, w2_p, w3_p, b_pack = prepared
    batch, input_size = s.shape
    in_pad = w1_p.shape[0]
    hid_pad = w2_p.shape[0]
    out_pad = w3_p.shape[1]
    lane_pad = b_pack.shape[1]
    cdt = w1_p.dtype

    # Adaptive batch tile: fewest >=16-row tiles of <= ~2048 rows.  For
    # batch > 1024 keep at least 2 grid steps so the "parallel" axis feeds
    # both v7x TensorCores (harmless on single-TC v5e/v6e).
    if batch > 1024:
        n_tiles = max(2, _cdiv(batch, 2048))
    else:
        n_tiles = 1
    tb = _round_up(max(_cdiv(batch, n_tiles), 16), 16)
    batch_pad = _round_up(batch, tb)
    grid = (batch_pad // tb,)

    # Single pad+cast of the activations per call (params are pre-processed).
    s_p = jnp.pad(s.astype(cdt),
                  ((0, batch_pad - batch), (0, in_pad - input_size)))

    out_p = pl.pallas_call(
        actor_kernel,
        out_shape=jax.ShapeDtypeStruct((batch_pad, out_pad), out_dtype),
        grid=grid,
        in_specs=[
            pl.BlockSpec((tb, in_pad), lambda i: (i, 0)),        # s: tiled over batch
            pl.BlockSpec((in_pad, hid_pad), lambda i: (0, 0)),   # weights: VMEM-resident
            pl.BlockSpec((hid_pad, hid_pad), lambda i: (0, 0)),
            pl.BlockSpec((hid_pad, out_pad), lambda i: (0, 0)),
            pl.BlockSpec((8, lane_pad), lambda i: (0, 0)),       # packed biases
        ],
        out_specs=pl.BlockSpec((tb, out_pad), lambda i: (i, 0)),
        compiler_params=pltpu.CompilerParams(
            dimension_semantics=("parallel",),   # megacore split on v7x
            vmem_limit_bytes=48 * 1024 * 1024,   # explicit, with headroom on all gens
        ),
    )(s_p, w1_p, w2_p, w3_p, b_pack)

    # Slice off batch padding rows (garbage) and feature padding columns.
    return out_p[:batch, :output_size]


def init_actor_params(key, input_size, hidden_size, output_size):
    """Deterministic init mimicking PyTorch nn.Linear default U(-1/sqrt(fan_in), +)."""
    ks = jax.random.split(key, 6)

    def linear(kw, kb, fan_in, fan_out):
        bound = 1.0 / jnp.sqrt(jnp.float32(fan_in))
        w = jax.random.uniform(kw, (fan_in, fan_out), jnp.float32, -bound, bound)
        b = jax.random.uniform(kb, (1, fan_out), jnp.float32, -bound, bound)
        return w, b

    w1, b1 = linear(ks[0], ks[1], input_size, hidden_size)
    w2, b2 = linear(ks[2], ks[3], hidden_size, hidden_size)
    w3, b3 = linear(ks[4], ks[5], hidden_size, output_size)
    return (w1, b1, w2, b2, w3, b3)


def actor_reference(s, params):
    """Pure-JAX f32 reference for correctness checking."""
    w1, b1, w2, b2, w3, b3 = params
    x = jnp.maximum(s @ w1 + b1, 0.0)
    x = jnp.maximum(x @ w2 + b2, 0.0)
    return 3.0 * jnp.tanh(x @ w3 + b3)


if __name__ == "__main__":
    key = jax.random.PRNGKey(0)
    k_in, k_params, k_big = jax.random.split(key, 3)

    batch, input_size, hidden_size, output_size = 2, 8, 32, 4
    s = jax.random.normal(k_in, (batch, input_size), dtype=jnp.float32)
    params = init_actor_params(k_params, input_size, hidden_size, output_size)
    ref = actor_reference(s, params)

    # Exact-path check (f32 MXU compute).
    prep_f32, out_size = prepare_actor_params(params, compute_dtype=jnp.float32)
    out_f32 = jax.block_until_ready(actor_forward(s, prep_f32, output_size=out_size))
    assert out_f32.shape == (batch, output_size)
    assert jnp.allclose(out_f32, ref, atol=1e-5, rtol=1e-5), "f32 mismatch vs reference"

    # Default bf16-operand / f32-accumulate path; loose tolerance vs f32 reference.
    prep_bf16, _ = prepare_actor_params(params)
    out_bf16 = jax.block_until_ready(actor_forward(s, prep_bf16, output_size=out_size))
    assert out_bf16.shape == (batch, output_size)
    assert jnp.allclose(out_bf16, ref, atol=1e-1, rtol=1e-1), "bf16 mismatch vs reference"

    # Adaptive single-tile path: batch=640 -> tb=640, grid=(1,), zero padding waste.
    s_640 = jax.random.normal(k_big, (640, input_size), dtype=jnp.float32)
    out_640 = jax.block_until_ready(actor_forward(s_640, prep_bf16, output_size=out_size))
    ref_640 = actor_reference(s_640, params)
    assert out_640.shape == (640, output_size)
    assert jnp.allclose(out_640, ref_640, atol=1e-1, rtol=1e-1), "640-batch mismatch"

    # Multi-tile grid path: batch=2500 -> 2 grid steps (feeds both v7x TCs).
    s_2500 = jax.random.normal(k_big, (2500, input_size), dtype=jnp.float32)
    out_2500 = jax.block_until_ready(actor_forward(s_2500, prep_bf16, output_size=out_size))
    ref_2500 = actor_reference(s_2500, params)
    assert out_2500.shape == (2500, output_size)
    assert jnp.allclose(out_2500, ref_2500, atol=1e-1, rtol=1e-1), "grid-path mismatch"

    print("KERNEL_OK")
</pallas_src>

<mosaic_0001>
module attributes {stable_mosaic.version = 11 : i64} {
  func.func @actor_kernel(%arg0: i32, %arg1: memref<16x128xf32, #tpu.memory_space<vmem>>, %arg2: memref<128x128xf32, #tpu.memory_space<vmem>>, %arg3: memref<128x128xf32, #tpu.memory_space<vmem>>, %arg4: memref<128x128xf32, #tpu.memory_space<vmem>>, %arg5: memref<8x128xf32, #tpu.memory_space<vmem>>, %arg6: memref<16x128xf32, #tpu.memory_space<vmem>>) attributes {dimension_semantics = [#tpu.dimension_semantics<parallel>], iteration_bounds = array<i64: 1>, scalar_prefetch = 0 : i64, scratch_operands = 0 : i64, tpu.core_type = #tpu.core_type<tc>, window_params = [{transform_indices = @transform_0, window_bounds = array<i64: 16, 128>}, {pipeline_mode = #tpu.pipeline_mode<synchronous>, transform_indices = @transform_1, window_bounds = array<i64: 128, 128>}, {pipeline_mode = #tpu.pipeline_mode<synchronous>, transform_indices = @transform_2, window_bounds = array<i64: 128, 128>}, {pipeline_mode = #tpu.pipeline_mode<synchronous>, transform_indices = @transform_3, window_bounds = array<i64: 128, 128>}, {pipeline_mode = #tpu.pipeline_mode<synchronous>, transform_indices = @transform_4, window_bounds = array<i64: 8, 128>}, {transform_indices = @transform_5, window_bounds = array<i64: 16, 128>}]} {
    %c0 = arith.constant 0 : index
    %c0_0 = arith.constant 0 : index
    %0 = vector.load %arg1[%c0, %c0_0] : memref<16x128xf32, #tpu.memory_space<vmem>>, vector<16x128xf32>
    %c0_1 = arith.constant 0 : index
    %c0_2 = arith.constant 0 : index
    %1 = vector.load %arg2[%c0_1, %c0_2] : memref<128x128xf32, #tpu.memory_space<vmem>>, vector<128x128xf32>
    %cst = arith.constant dense<0.000000e+00> : vector<16x128xf32>
    %2 = tpu.matmul %0, %1, %cst {dimension_numbers = #tpu.dot_dimension_numbers<[1], [0], [0], [1], [0, 0, 1, 1], [], []>} : vector<16x128xf32>, vector<128x128xf32>, vector<16x128xf32> -> vector<16x128xf32>
    %c0_3 = arith.constant 0 : index
    %c0_4 = arith.constant 0 : index
    %3 = vector.load %arg5[%c0_3, %c0_4] : memref<8x128xf32, #tpu.memory_space<vmem>>, vector<1x128xf32>
    %4 = vector.broadcast %3 : vector<1x128xf32> to vector<16x128xf32>
    %5 = arith.addf %2, %4 : vector<16x128xf32>
    %cst_5 = arith.constant 0.000000e+00 : f32
    %6 = vector.broadcast %cst_5 : f32 to vector<16x128xf32>
    %7 = arith.maximumf %5, %6 : vector<16x128xf32>
    %c0_6 = arith.constant 0 : index
    %c0_7 = arith.constant 0 : index
    %8 = vector.load %arg3[%c0_6, %c0_7] : memref<128x128xf32, #tpu.memory_space<vmem>>, vector<128x128xf32>
    %cst_8 = arith.constant dense<0.000000e+00> : vector<16x128xf32>
    %9 = tpu.matmul %7, %8, %cst_8 {dimension_numbers = #tpu.dot_dimension_numbers<[1], [0], [0], [1], [0, 0, 1, 1], [], []>} : vector<16x128xf32>, vector<128x128xf32>, vector<16x128xf32> -> vector<16x128xf32>
    %c1 = arith.constant 1 : index
    %c0_9 = arith.constant 0 : index
    %10 = vector.load %arg5[%c1, %c0_9] : memref<8x128xf32, #tpu.memory_space<vmem>>, vector<1x128xf32>
    %11 = vector.broadcast %10 : vector<1x128xf32> to vector<16x128xf32>
    %12 = arith.addf %9, %11 : vector<16x128xf32>
    %cst_10 = arith.constant 0.000000e+00 : f32
    %13 = vector.broadcast %cst_10 : f32 to vector<16x128xf32>
    %14 = arith.maximumf %12, %13 : vector<16x128xf32>
    %c0_11 = arith.constant 0 : index
    %c0_12 = arith.constant 0 : index
    %15 = vector.load %arg4[%c0_11, %c0_12] : memref<128x128xf32, #tpu.memory_space<vmem>>, vector<128x128xf32>
    %cst_13 = arith.constant dense<0.000000e+00> : vector<16x128xf32>
    %16 = tpu.matmul %14, %15, %cst_13 {dimension_numbers = #tpu.dot_dimension_numbers<[1], [0], [0], [1], [0, 0, 1, 1], [], []>} : vector<16x128xf32>, vector<128x128xf32>, vector<16x128xf32> -> vector<16x128xf32>
    %c2 = arith.constant 2 : index
    %c0_14 = arith.constant 0 : index
    %17 = vector.load %arg5[%c2, %c0_14] : memref<8x128xf32, #tpu.memory_space<vmem>>, vector<1x128xf32>
    %18 = vector.broadcast %17 : vector<1x128xf32> to vector<16x128xf32>
    %19 = arith.addf %16, %18 : vector<16x128xf32>
    %20 = math.tanh %19 : vector<16x128xf32>
    %cst_15 = arith.constant 3.000000e+00 : f32
    %21 = vector.broadcast %cst_15 : f32 to vector<16x128xf32>
    %22 = arith.mulf %21, %20 : vector<16x128xf32>
    %c0_16 = arith.constant 0 : index
    %c0_17 = arith.constant 0 : index
    %23 = vector.load %arg6[%c0_16, %c0_17] : memref<16x128xf32, #tpu.memory_space<vmem>>, vector<16x128xf32>
    tpu.vector_store %arg6[%c0_16, %c0_17], %22 {strides = array<i32>} : memref<16x128xf32, #tpu.memory_space<vmem>>, vector<16x128xf32>,
    return
  }
  func.func @transform_0(%arg0: i32) -> (i32, i32) {
    %c0_i32 = arith.constant 0 : i32
    %c0_i32_0 = arith.constant 0 : i32
    return %arg0, %c0_i32 : i32, i32
  }
  func.func @transform_1(%arg0: i32) -> (i32, i32) {
    %c0_i32 = arith.constant 0 : i32
    %c0_i32_0 = arith.constant 0 : i32
    %c0_i32_1 = arith.constant 0 : i32
    return %c0_i32, %c0_i32_0 : i32, i32
  }
  func.func @transform_2(%arg0: i32) -> (i32, i32) {
    %c0_i32 = arith.constant 0 : i32
    %c0_i32_0 = arith.constant 0 : i32
    %c0_i32_1 = arith.constant 0 : i32
    return %c0_i32, %c0_i32_0 : i32, i32
  }
  func.func @transform_3(%arg0: i32) -> (i32, i32) {
    %c0_i32 = arith.constant 0 : i32
    %c0_i32_0 = arith.constant 0 : i32
    %c0_i32_1 = arith.constant 0 : i32
    return %c0_i32, %c0_i32_0 : i32, i32
  }
  func.func @transform_4(%arg0: i32) -> (i32, i32) {
    %c0_i32 = arith.constant 0 : i32
    %c0_i32_0 = arith.constant 0 : i32
    %c0_i32_1 = arith.constant 0 : i32
    return %c0_i32, %c0_i32_0 : i32, i32
  }
  func.func @transform_5(%arg0: i32) -> (i32, i32) {
    %c0_i32 = arith.constant 0 : i32
    %c0_i32_0 = arith.constant 0 : i32
    return %arg0, %c0_i32 : i32, i32
  }
}

</mosaic_0001>

<llo_original>
// kernel: actor_forward.1
$region0: #{actor_forward.1}
  #allocation0 [shape = 'u32[]', space=smem, size = 0x4, offset = 0x4, fixed_abs, tag = 'smem constant byte address 0x4 - core index']
  #allocation1 [shape = 'u32[144,128]{1,0:T(1,128)}', space=vmem, size = 0x12000, scoped, tag = 'internal scratch']
  %s0 = inlined_call_operand.vmem [shape: f32[16,128], index: 0, kind: input, shape index: {}]
  %s1 = inlined_call_operand.hbm [shape: f32[128,128], index: 1, kind: input, shape index: {}]
  %s2 = inlined_call_operand.hbm [shape: f32[128,128], index: 2, kind: input, shape index: {}]
  %s3 = inlined_call_operand.hbm [shape: f32[128,128], index: 3, kind: input, shape index: {}]
  %s4 = inlined_call_operand.vmem [shape: f32[8,128], index: 4, kind: input, shape index: {}]
  %s5 = inlined_call_operand.vmem [shape: f32[16,128], index: 5, kind: output, shape index: {}]
  %s6 = sld [smem:[#allocation0]]
  $region42: #{actor_forward.1} parent=0
    _
  %s8 = ssub.s32 1, %s6
  %s9 = scalar_select 0, %s8, %s6
  $region1: #{actor_forward.1} parent=0
    #allocation2 [shape = 'u8[65536]{0}', space=vmem, size = 0x10000, scoped, tag = 'input window, operand 1, single buffered']
    #allocation3 [shape = 's32[1]{0}', space=sflag, size = 0x4, scoped, tag = 'scoped memory for actor_forward.1']
    #allocation4 [shape = 'u8[65536]{0}', space=vmem, size = 0x10000, scoped, tag = 'input window, operand 2, single buffered']
    #allocation5 [shape = 's32[1]{0}', space=sflag, size = 0x4, scoped, tag = 'scoped memory for actor_forward.1']
    #allocation6 [shape = 'u8[65536]{0}', space=vmem, size = 0x10000, scoped, tag = 'input window, operand 3, single buffered']
    %10 = vsyncpa [#allocation3], 0
    %11 = vsyncpa [#allocation5], 0
    // Predicated region
    $region2: #{actor_forward.1} parent=1 // pred_check
      _
    $region3: #{actor_forward.1} parent=1 // pred_check_branch
      %13 = sbr.rel (0) target = $region5
    $region4: #{actor_forward.1} parent=1 // pred_region
      _
    $region5: #{actor_forward.1} parent=1 // pred_fallthru
      _
    // Predicated region
    $region6: #{actor_forward.1} parent=1 // pred_check
      _
    $region7: #{actor_forward.1} parent=1 // pred_check_branch
      %15 = sbr.rel (0) target = $region9
    $region8: #{actor_forward.1} parent=1 // pred_region
      %s17 = ssub.s32 2048, 2048
      %18 = vsyncadd [#allocation3], %s17
      %s19 = sshll.u32 [#allocation2], 4
      %s20 = int_to_ptr.vmem [resolvable:$true] %s19
      %25 = dma.hbm_to_vmem [thread:$0]  %s1, 2048, %s20, [#allocation3], 128, 128, 8
    $region9: #{actor_forward.1} parent=1 // pred_fallthru
      _
    // Predicated region
    $region10: #{actor_forward.1} parent=1 // pred_check
      _
    $region11: #{actor_forward.1} parent=1 // pred_check_branch
      %27 = sbr.rel (0) target = $region13
    $region12: #{actor_forward.1} parent=1 // pred_region
      %s29 = ssub.s32 2048, 2048
      %30 = vsyncadd [#allocation5], %s29
      %s31 = sshll.u32 [#allocation4], 4
      %s32 = int_to_ptr.vmem [resolvable:$true] %s31
      %37 = dma.hbm_to_vmem [thread:$0]  %s2, 2048, %s32, [#allocation5], 128, 128, 8
    $region13: #{actor_forward.1} parent=1 // pred_fallthru
      _
    // Predicated region
    $region14: #{actor_forward.1} parent=1 // pred_check
      _
    $region15: #{actor_forward.1} parent=1 // pred_check_branch
      %39 = sbr.rel (0) target = $region17
    $region16: #{actor_forward.1} parent=1 // pred_region
      %s41 = ssub.s32 2048, 2048
      %42 = vsyncadd [#allocation5], %s41
      %s43 = sshll.u32 [#allocation6], 4
      %s44 = int_to_ptr.vmem [resolvable:$true] %s43
      %49 = dma.hbm_to_vmem [thread:$0]  %s3, 2048, %s44, [#allocation5], 128, 128, 8
    $region17: #{actor_forward.1} parent=1 // pred_fallthru
      _
    // Predicated region
    $region18: #{actor_forward.1} parent=1 // pred_check
      _
    $region19: #{actor_forward.1} parent=1 // pred_check_branch
      %51 = sbr.rel (0) target = $region21
    $region20: #{actor_forward.1} parent=1 // pred_region
      _
    $region21: #{actor_forward.1} parent=1 // pred_fallthru
      _
    // Predicated region
    $region22: #{actor_forward.1} parent=1 // pred_check
      _
    $region23: #{actor_forward.1} parent=1 // pred_check_branch
      %53 = sbr.rel (0) target = $region25
    $region24: #{actor_forward.1} parent=1 // pred_region
      %54 = dma.done [#allocation3], 2048
    $region25: #{actor_forward.1} parent=1 // pred_fallthru
      _
    // Predicated region
    $region26: #{actor_forward.1} parent=1 // pred_check
      _
    $region27: #{actor_forward.1} parent=1 // pred_check_branch
      %56 = sbr.rel (0) target = $region29
    $region28: #{actor_forward.1} parent=1 // pred_region
      %57 = dma.done [#allocation5], 2048
    $region29: #{actor_forward.1} parent=1 // pred_fallthru
      _
    // Predicated region
    $region30: #{actor_forward.1} parent=1 // pred_check
      _
    $region31: #{actor_forward.1} parent=1 // pred_check_branch
      %59 = sbr.rel (0) target = $region33
    $region32: #{actor_forward.1} parent=1 // pred_region
      %60 = dma.done [#allocation5], 2048
    $region33: #{actor_forward.1} parent=1 // pred_fallthru
      _
    %v61 = vld [vmem:[%s0] sm:$0xff]
    %v62 = vld [vmem:[%s0 + $0x8] sm:$0xff]
    %v63 = vld [vmem:[#allocation2] sm:$0xff]
    %v64 = vld [vmem:[#allocation2 + $0x8] sm:$0xff]
    %v65 = vld [vmem:[#allocation2 + $0x10] sm:$0xff]
    %v66 = vld [vmem:[#allocation2 + $0x18] sm:$0xff]
    %v67 = vld [vmem:[#allocation2 + $0x20] sm:$0xff]
    %v68 = vld [vmem:[#allocation2 + $0x28] sm:$0xff]
    %v69 = vld [vmem:[#allocation2 + $0x30] sm:$0xff]
    %v70 = vld [vmem:[#allocation2 + $0x38] sm:$0xff]
    %v71 = vld [vmem:[#allocation2 + $0x40] sm:$0xff]
    %v72 = vld [vmem:[#allocation2 + $0x48] sm:$0xff]
    %v73 = vld [vmem:[#allocation2 + $0x50] sm:$0xff]
    %v74 = vld [vmem:[#allocation2 + $0x58] sm:$0xff]
    %v75 = vld [vmem:[#allocation2 + $0x60] sm:$0xff]
    %v76 = vld [vmem:[#allocation2 + $0x68] sm:$0xff]
    %v77 = vld [vmem:[#allocation2 + $0x70] sm:$0xff]
    %v78 = vld [vmem:[#allocation2 + $0x78] sm:$0xff]
    %v79 = vld [vmem:[%s4] sm:$0x1]
    %v80 = vlaneseq
    %v81 = vshrl.u32 %v80, 7
    %v82 = vsub.s32 0, %v81
    %v83 = vrot.slane %v79, %v82
    %84 = vmatprep.subr.mxu0 0.0
    %85 = vmatpush1.msra.mxu0 %v63
    %86 = vmatprep.subr.mxu0 0.0
    %87 = vmatpush1.msra.mxu0 %v64
    %88 = vmatprep.subr.mxu0 0.0
    %89 = vmatpush1.msra.mxu0 %v65
    %90 = vmatprep.subr.mxu0 0.0
    %91 = vmatpush1.msra.mxu0 %v66
    %92 = vmatprep.subr.mxu0 0.0
    %93 = vmatpush1.msra.mxu0 %v67
    %94 = vmatprep.subr.mxu0 0.0
    %95 = vmatpush1.msra.mxu0 %v68
    %96 = vmatprep.subr.mxu0 0.0
    %97 = vmatpush1.msra.mxu0 %v69
    %98 = vmatprep.subr.mxu0 0.0
    %99 = vmatpush1.msra.mxu0 %v70
    %100 = vmatprep.subr.mxu0 0.0
    %101 = vmatpush1.msra.mxu0 %v71
    %102 = vmatprep.subr.mxu0 0.0
    %103 = vmatpush1.msra.mxu0 %v72
    %104 = vmatprep.subr.mxu0 0.0
    %105 = vmatpush1.msra.mxu0 %v73
    %106 = vmatprep.subr.mxu0 0.0
    %107 = vmatpush1.msra.mxu0 %v74
    %108 = vmatprep.subr.mxu0 0.0
    %109 = vmatpush1.msra.mxu0 %v75
    %110 = vmatprep.subr.mxu0 0.0
    %111 = vmatpush1.msra.mxu0 %v76
    %112 = vmatprep.subr.mxu0 0.0
    %113 = vmatpush1.msra.mxu0 %v77
    %114 = vmatprep.subr.mxu0 0.0
    %115 = vmatpush1.msra.mxu0 %v78
    %116 = vmatprep.subr.mxu0 0.0
    %117 = vmatpush1.msra.mxu0 0.0
    %118 = vmatprep.subr.mxu0 0.0
    %119 = vmatpush1.msra.mxu0 0.0
    %120 = vmatprep.subr.mxu0 0.0
    %121 = vmatpush1.msra.mxu0 0.0
    %122 = vmatprep.subr.mxu0 0.0
    %123 = vmatpush1.msra.mxu0 0.0
    %124 = vmatprep.subr.mxu0 0.0
    %125 = vmatpush1.msra.mxu0 0.0
    %126 = vmatprep.subr.mxu0 0.0
    %127 = vmatpush1.msra.mxu0 0.0
    %128 = vmatprep.subr.mxu0 0.0
    %129 = vmatpush1.msra.mxu0 0.0
    %130 = vmatprep.subr.mxu0 0.0
    %131 = vmatpush1.msra.mxu0 0.0
    %132 = vmatprep.subr.mxu0 0.0
    %133 = vmatpush1.msra.mxu0 0.0
    %134 = vmatprep.subr.mxu0 0.0
    %135 = vmatpush1.msra.mxu0 0.0
    %136 = vmatprep.subr.mxu0 0.0
    %137 = vmatpush1.msra.mxu0 0.0
    %138 = vmatprep.subr.mxu0 0.0
    %139 = vmatpush1.msra.mxu0 0.0
    %140 = vmatprep.subr.mxu0 0.0
    %141 = vmatpush1.msra.mxu0 0.0
    %142 = vmatprep.subr.mxu0 0.0
    %143 = vmatpush1.msra.mxu0 0.0
    %144 = vmatprep.subr.mxu0 0.0
    %145 = vmatpush1.msra.mxu0 0.0
    %146 = vmatprep.subr.mxu0 0.0
    %147 = vmatpush1.msra.mxu0 0.0
    %148 = vmatprep.mubr.f32.mxu0 0.0
    %149 = vmatmul.mubr.f32.gmra.mrb[0].mxu0 %v61
    %v150 = vpop.f32.mrb[0].mxu0
    %v151 = vadd.f32 %v83, %v150
    %v152 = vpop.f32.mrb[0].mxu0
    %153 = vmatprep.mubr.f32.mxu0 0.0
    %154 = vmatmul.mubr.f32.gmra.mrb[0].mxu0 %v62
    %v155 = vpop.f32.mrb[0].mxu0
    %v156 = vadd.f32 %v83, %v155
    %v157 = vpop.f32.mrb[0].mxu0
    %158 = vdwg.mxu0
    %v159 = vmax.f32 %v151, 0.0
    %v160 = vmax.f32 %v156, 0.0
    %v161 = vld [vmem:[#allocation4] sm:$0xff]
    %v162 = vld [vmem:[#allocation4 + $0x8] sm:$0xff]
    %v163 = vld [vmem:[#allocation4 + $0x10] sm:$0xff]
    %v164 = vld [vmem:[#allocation4 + $0x18] sm:$0xff]
    %v165 = vld [vmem:[#allocation4 + $0x20] sm:$0xff]
    %v166 = vld [vmem:[#allocation4 + $0x28] sm:$0xff]
    %v167 = vld [vmem:[#allocation4 + $0x30] sm:$0xff]
    %v168 = vld [vmem:[#allocation4 + $0x38] sm:$0xff]
    %v169 = vld [vmem:[#allocation4 + $0x40] sm:$0xff]
    %v170 = vld [vmem:[#allocation4 + $0x48] sm:$0xff]
    %v171 = vld [vmem:[#allocation4 + $0x50] sm:$0xff]
    %v172 = vld [vmem:[#allocation4 + $0x58] sm:$0xff]
    %v173 = vld [vmem:[#allocation4 + $0x60] sm:$0xff]
    %v174 = vld [vmem:[#allocation4 + $0x68] sm:$0xff]
    %v175 = vld [vmem:[#allocation4 + $0x70] sm:$0xff]
    %v176 = vld [vmem:[#allocation4 + $0x78] sm:$0xff]
    %v177 = vld [vmem:[%s4 + $0x1] sm:$0x1]
    %v178 = vlaneseq
    %v179 = vshrl.u32 %v178, 7
    %v180 = vsub.s32 0, %v179
    %v181 = vrot.slane %v177, %v180
    %182 = vmatprep.subr.mxu0 0.0
    %183 = vmatpush1.msra.mxu0 %v161
    %184 = vmatprep.subr.mxu0 0.0
    %185 = vmatpush1.msra.mxu0 %v162
    %186 = vmatprep.subr.mxu0 0.0
    %187 = vmatpush1.msra.mxu0 %v163
    %188 = vmatprep.subr.mxu0 0.0
    %189 = vmatpush1.msra.mxu0 %v164
    %190 = vmatprep.subr.mxu0 0.0
    %191 = vmatpush1.msra.mxu0 %v165
    %192 = vmatprep.subr.mxu0 0.0
    %193 = vmatpush1.msra.mxu0 %v166
    %194 = vmatprep.subr.mxu0 0.0
    %195 = vmatpush1.msra.mxu0 %v167
    %196 = vmatprep.subr.mxu0 0.0
    %197 = vmatpush1.msra.mxu0 %v168
    %198 = vmatprep.subr.mxu0 0.0
    %199 = vmatpush1.msra.mxu0 %v169
    %200 = vmatprep.subr.mxu0 0.0
    %201 = vmatpush1.msra.mxu0 %v170
    %202 = vmatprep.subr.mxu0 0.0
    %203 = vmatpush1.msra.mxu0 %v171
    %204 = vmatprep.subr.mxu0 0.0
    %205 = vmatpush1.msra.mxu0 %v172
    %206 = vmatprep.subr.mxu0 0.0
    %207 = vmatpush1.msra.mxu0 %v173
    %208 = vmatprep.subr.mxu0 0.0
    %209 = vmatpush1.msra.mxu0 %v174
    %210 = vmatprep.subr.mxu0 0.0
    %211 = vmatpush1.msra.mxu0 %v175
    %212 = vmatprep.subr.mxu0 0.0
    %213 = vmatpush1.msra.mxu0 %v176
    %214 = vmatprep.subr.mxu0 0.0
    %215 = vmatpush1.msra.mxu0 0.0
    %216 = vmatprep.subr.mxu0 0.0
    %217 = vmatpush1.msra.mxu0 0.0
    %218 = vmatprep.subr.mxu0 0.0
    %219 = vmatpush1.msra.mxu0 0.0
    %220 = vmatprep.subr.mxu0 0.0
    %221 = vmatpush1.msra.mxu0 0.0
    %222 = vmatprep.subr.mxu0 0.0
    %223 = vmatpush1.msra.mxu0 0.0
    %224 = vmatprep.subr.mxu0 0.0
    %225 = vmatpush1.msra.mxu0 0.0
    %226 = vmatprep.subr.mxu0 0.0
    %227 = vmatpush1.msra.mxu0 0.0
    %228 = vmatprep.subr.mxu0 0.0
    %229 = vmatpush1.msra.mxu0 0.0
    %230 = vmatprep.subr.mxu0 0.0
    %231 = vmatpush1.msra.mxu0 0.0
    %232 = vmatprep.subr.mxu0 0.0
    %233 = vmatpush1.msra.mxu0 0.0
    %234 = vmatprep.subr.mxu0 0.0
    %235 = vmatpush1.msra.mxu0 0.0
    %236 = vmatprep.subr.mxu0 0.0
    %237 = vmatpush1.msra.mxu0 0.0
    %238 = vmatprep.subr.mxu0 0.0
    %239 = vmatpush1.msra.mxu0 0.0
    %240 = vmatprep.subr.mxu0 0.0
    %241 = vmatpush1.msra.mxu0 0.0
    %242 = vmatprep.subr.mxu0 0.0
    %243 = vmatpush1.msra.mxu0 0.0
    %244 = vmatprep.subr.mxu0 0.0
    %245 = vmatpush1.msra.mxu0 0.0
    %246 = vmatprep.mubr.f32.mxu0 0.0
    %247 = vmatmul.mubr.f32.gmra.mrb[0].mxu0 %v159
    %v248 = vpop.f32.mrb[0].mxu0
    %v249 = vadd.f32 %v181, %v248
    %v250 = vpop.f32.mrb[0].mxu0
    %251 = vmatprep.mubr.f32.mxu0 0.0
    %252 = vmatmul.mubr.f32.gmra.mrb[0].mxu0 %v160
    %v253 = vpop.f32.mrb[0].mxu0
    %v254 = vadd.f32 %v181, %v253
    %v255 = vpop.f32.mrb[0].mxu0
    %256 = vdwg.mxu0
    %v257 = vmax.f32 %v249, 0.0
    %v258 = vmax.f32 %v254, 0.0
    %v259 = vld [vmem:[#allocation6] sm:$0xff]
    %v260 = vld [vmem:[#allocation6 + $0x8] sm:$0xff]
    %v261 = vld [vmem:[#allocation6 + $0x10] sm:$0xff]
    %v262 = vld [vmem:[#allocation6 + $0x18] sm:$0xff]
    %v263 = vld [vmem:[#allocation6 + $0x20] sm:$0xff]
    %v264 = vld [vmem:[#allocation6 + $0x28] sm:$0xff]
    %v265 = vld [vmem:[#allocation6 + $0x30] sm:$0xff]
    %v266 = vld [vmem:[#allocation6 + $0x38] sm:$0xff]
    %v267 = vld [vmem:[#allocation6 + $0x40] sm:$0xff]
    %v268 = vld [vmem:[#allocation6 + $0x48] sm:$0xff]
    %v269 = vld [vmem:[#allocation6 + $0x50] sm:$0xff]
    %v270 = vld [vmem:[#allocation6 + $0x58] sm:$0xff]
    %v271 = vld [vmem:[#allocation6 + $0x60] sm:$0xff]
    %v272 = vld [vmem:[#allocation6 + $0x68] sm:$0xff]
    %v273 = vld [vmem:[#allocation6 + $0x70] sm:$0xff]
    %v274 = vld [vmem:[#allocation6 + $0x78] sm:$0xff]
    %v275 = vld [vmem:[%s4 + $0x2] sm:$0x1]
    %v276 = vlaneseq
    %v277 = vshrl.u32 %v276, 7
    %v278 = vsub.s32 0, %v277
    %v279 = vrot.slane %v275, %v278
    %280 = vmatprep.subr.mxu0 0.0
    %281 = vmatpush1.msra.mxu0 %v259
    %282 = vmatprep.subr.mxu0 0.0
    %283 = vmatpush1.msra.mxu0 %v260
    %284 = vmatprep.subr.mxu0 0.0
    %285 = vmatpush1.msra.mxu0 %v261
    %286 = vmatprep.subr.mxu0 0.0
    %287 = vmatpush1.msra.mxu0 %v262
    %288 = vmatprep.subr.mxu0 0.0
    %289 = vmatpush1.msra.mxu0 %v263
    %290 = vmatprep.subr.mxu0 0.0
    %291 = vmatpush1.msra.mxu0 %v264
    %292 = vmatprep.subr.mxu0 0.0
    %293 = vmatpush1.msra.mxu0 %v265
    %294 = vmatprep.subr.mxu0 0.0
    %295 = vmatpush1.msra.mxu0 %v266
    %296 = vmatprep.subr.mxu0 0.0
    %297 = vmatpush1.msra.mxu0 %v267
    %298 = vmatprep.subr.mxu0 0.0
    %299 = vmatpush1.msra.mxu0 %v268
    %300 = vmatprep.subr.mxu0 0.0
    %301 = vmatpush1.msra.mxu0 %v269
    %302 = vmatprep.subr.mxu0 0.0
    %303 = vmatpush1.msra.mxu0 %v270
    %304 = vmatprep.subr.mxu0 0.0
    %305 = vmatpush1.msra.mxu0 %v271
    %306 = vmatprep.subr.mxu0 0.0
    %307 = vmatpush1.msra.mxu0 %v272
    %308 = vmatprep.subr.mxu0 0.0
    %309 = vmatpush1.msra.mxu0 %v273
    %310 = vmatprep.subr.mxu0 0.0
    %311 = vmatpush1.msra.mxu0 %v274
    %312 = vmatprep.subr.mxu0 0.0
    %313 = vmatpush1.msra.mxu0 0.0
    %314 = vmatprep.subr.mxu0 0.0
    %315 = vmatpush1.msra.mxu0 0.0
    %316 = vmatprep.subr.mxu0 0.0
    %317 = vmatpush1.msra.mxu0 0.0
    %318 = vmatprep.subr.mxu0 0.0
    %319 = vmatpush1.msra.mxu0 0.0
    %320 = vmatprep.subr.mxu0 0.0
    %321 = vmatpush1.msra.mxu0 0.0
    %322 = vmatprep.subr.mxu0 0.0
    %323 = vmatpush1.msra.mxu0 0.0
    %324 = vmatprep.subr.mxu0 0.0
    %325 = vmatpush1.msra.mxu0 0.0
    %326 = vmatprep.subr.mxu0 0.0
    %327 = vmatpush1.msra.mxu0 0.0
    %328 = vmatprep.subr.mxu0 0.0
    %329 = vmatpush1.msra.mxu0 0.0
    %330 = vmatprep.subr.mxu0 0.0
    %331 = vmatpush1.msra.mxu0 0.0
    %332 = vmatprep.subr.mxu0 0.0
    %333 = vmatpush1.msra.mxu0 0.0
    %334 = vmatprep.subr.mxu0 0.0
    %335 = vmatpush1.msra.mxu0 0.0
    %336 = vmatprep.subr.mxu0 0.0
    %337 = vmatpush1.msra.mxu0 0.0
    %338 = vmatprep.subr.mxu0 0.0
    %339 = vmatpush1.msra.mxu0 0.0
    %340 = vmatprep.subr.mxu0 0.0
    %341 = vmatpush1.msra.mxu0 0.0
    %342 = vmatprep.subr.mxu0 0.0
    %343 = vmatpush1.msra.mxu0 0.0
    %344 = vmatprep.mubr.f32.mxu0 0.0
    %345 = vmatmul.mubr.f32.gmra.mrb[0].mxu0 %v257
    %v346 = vpop.f32.mrb[0].mxu0
    %v347 = vadd.f32 %v279, %v346
    %v348 = vpop.f32.mrb[0].mxu0
    %349 = vmatprep.mubr.f32.mxu0 0.0
    %350 = vmatmul.mubr.f32.gmra.mrb[0].mxu0 %v258
    %v351 = vpop.f32.mrb[0].mxu0
    %v352 = vadd.f32 %v279, %v351
    %v353 = vpop.f32.mrb[0].mxu0
    %354 = vdwg.mxu0
    %v355 = vtanh.pop %v347
    %v356 = vtanh.pop %v352
    %v357 = vmul.f32 %v355, 3.0
    %v358 = vmul.f32 %v356, 3.0
    %359 = vst [vmem:[%s5] sm:$0xff] %v357
    %360 = vst [vmem:[%s5 + $0x8] sm:$0xff] %v358
    // Predicated region
    $region34: #{actor_forward.1} parent=1 // pred_check
      _
    $region35: #{actor_forward.1} parent=1 // pred_check_branch
      %362 = sbr.rel (0) target = $region37
    $region36: #{actor_forward.1} parent=1 // pred_region
      _
    $region37: #{actor_forward.1} parent=1 // pred_fallthru
      _
    // Predicated region
    $region38: #{actor_forward.1} parent=1 // pred_check
      _
    $region39: #{actor_forward.1} parent=1 // pred_check_branch
      %364 = sbr.rel (0) target = $region41
    $region40: #{actor_forward.1} parent=1 // pred_region
      _
    $region41: #{actor_forward.1} parent=1 // pred_fallthru
      _
    %365 = vsyncpa [#allocation3], 1
    %366 = vsyncpa [#allocation5], 1

</llo_original>
